<compile_context>
chip_gen: v7x
topology: tpu7x:2x2x1
jax: 0.10.0
libtpu: 0.0.40
codegen_flags: <defaults>
</compile_context>

<pallas_src>
import functools
import math

import jax
import jax.numpy as jnp
from jax.experimental import pallas as pl


def _randconv_kernel(w_ref, xs_ref, b_ref, o_ref, *, hw_img, idx55):
    # w_ref : (Cout, K*K*Cin)      flattened conv weights (tap-major, ci-minor)
    # xs_ref: (K*K*Cin, N*Ho*Wo)   im2col columns (batch-0 image = cols [0, Ho*Wo))
    # b_ref : (Cout, 1)            bias
    # o_ref : (Cout, N*Ho*Wo)      lane-dense output
    acc = jnp.dot(w_ref[...], xs_ref[...], preferred_element_type=jnp.float32)
    acc = acc + b_ref[...].astype(jnp.float32)        # (Cout, 1) broadcasts over lanes

    # Data-dependent global sign flip, decided on the f32 accumulator.
    # plane = output[0, 0, :, :] -> row 0 (channel 0), cols [0, Ho*Wo) (batch 0).
    plane = acc[0:1, 0:hw_img]                        # (1, Ho*Wo)  aligned slice
    mx = jnp.max(plane, axis=1, keepdims=True)        # (1, 1)
    mn = jnp.min(plane, axis=1, keepdims=True)        # (1, 1)
    col = jax.lax.broadcasted_iota(jnp.int32, plane.shape, 1)
    v55 = jnp.sum(jnp.where(col == idx55, plane, 0.0), axis=1, keepdims=True)
    flip = (mx - v55) < (v55 - mn)                    # (1, 1) bool

    o_ref[...] = jnp.where(flip, -acc, acc).astype(o_ref.dtype)


def multiscale_randconv2d_forward(x_nchw, weight_oihw, bias, pad):
    """Forward pass of MultiScaleRandConv2d for the currently-selected scale.

    x_nchw      : (N, Cin, H, W)    float32
    weight_oihw : (Cout, Cin, K, K) float32 (PyTorch conv weight layout)
    bias        : (Cout,)           float32
    pad         : int, = K // 2
    returns     : (N, Cout, Ho, Wo) float32
    """
    N, Cin, H, W = x_nchw.shape
    Cout, _, K, _ = weight_oihw.shape
    assert pad == K // 2

    x_p = jnp.pad(x_nchw, ((0, 0), (0, 0), (pad, pad), (pad, pad)))
    Hp, Wp = H + 2 * pad, W + 2 * pad
    Ho, Wo = Hp - K + 1, Wp - K + 1
    # The module hard-codes output[0, 0, 5, 5]; fail loudly instead of silently
    # indexing a different location on tiny inputs.
    assert Ho > 5 and Wo > 5, "MultiScaleRandConv2d requires output spatial dims > 5"

    # --- XLA glue: transposed im2col so N*Ho*Wo lands on the lane axis ---
    # rows: (kh, kw) major, ci minor; cols: n major, (ho, wo) minor.
    taps = [x_p[:, :, kh:kh + Ho, kw:kw + Wo]          # (N, Cin, Ho, Wo) each
            for kh in range(K) for kw in range(K)]
    xs = (jnp.stack(taps, axis=0)                      # (K*K, N, Cin, Ho, Wo)
          .transpose(0, 2, 1, 3, 4)                    # (K*K, Cin, N, Ho, Wo)
          .reshape(K * K * Cin, N * Ho * Wo))
    # (Cout, Cin, K, K) -> (Cout, K, K, Cin) -> (Cout, K*K*Cin): matches xs rows.
    w_mat = jnp.transpose(weight_oihw, (0, 2, 3, 1)).reshape(Cout, K * K * Cin)
    b2 = bias.reshape(Cout, 1).astype(jnp.float32)

    kernel = functools.partial(_randconv_kernel, hw_img=Ho * Wo, idx55=5 * Wo + 5)

    # Single invocation (no grid): one fused, lane-dense GEMM + bias + sign flip.
    out = pl.pallas_call(
        kernel,
        out_shape=jax.ShapeDtypeStruct((Cout, N * Ho * Wo), jnp.float32),
        in_specs=[
            pl.BlockSpec((Cout, K * K * Cin), lambda: (0, 0)),
            pl.BlockSpec((K * K * Cin, N * Ho * Wo), lambda: (0, 0)),
            pl.BlockSpec((Cout, 1), lambda: (0, 0)),
        ],
        out_specs=pl.BlockSpec((Cout, N * Ho * Wo), lambda: (0, 0)),
    )(w_mat, xs, b2)

    out = out.reshape(Cout, N, Ho, Wo)
    return jnp.transpose(out, (1, 0, 2, 3)).astype(x_nchw.dtype)   # back to NCHW


def _reference_forward(x_nchw, weight_oihw, bias, pad):
    """Pure-JAX reference mirroring the PyTorch forward (for verification)."""
    x = jnp.transpose(x_nchw, (0, 2, 3, 1))
    w = jnp.transpose(weight_oihw, (2, 3, 1, 0))  # HWIO
    y = jax.lax.conv_general_dilated(
        x, w, window_strides=(1, 1),
        padding=[(pad, pad), (pad, pad)],
        dimension_numbers=("NHWC", "HWIO", "NHWC"),
    ) + bias[None, None, None, :]
    plane = y[0, :, :, 0]
    v55 = y[0, 5, 5, 0]
    flip = (plane.max() - v55) < (v55 - plane.min())
    y = jnp.where(flip, -y, y)
    return jnp.transpose(y, (0, 3, 1, 2))


if __name__ == "__main__":
    key = jax.random.PRNGKey(0)
    k_sel, k_w, k_b, k_x = jax.random.split(key, 4)

    # Module config: MultiScaleRandConv2d(in_channels=4, out_channels=4,
    #                                     kernel_sizes=(1, 3, 5))
    kernel_sizes = (1, 3, 5)
    in_c, out_c = 4, 4
    N, H, W = 2, 16, 16

    # randomize(): deterministically pick the current scale.
    idx = int(jax.random.randint(k_sel, (), 0, len(kernel_sizes)))
    K = kernel_sizes[idx]
    pad = K // 2

    # RandConv2d.randomize(), distribution='kaiming_normal':
    #   gain('conv2d') = 1, fan_in = Cin*K*K, std = 1/sqrt(fan_in)
    #   bias ~ U(-1/sqrt(fan_in), 1/sqrt(fan_in))
    fan_in = in_c * K * K
    std = 1.0 / math.sqrt(fan_in)
    weight = jax.random.normal(k_w, (out_c, in_c, K, K), jnp.float32) * std
    bound = 1.0 / math.sqrt(fan_in)
    bias = jax.random.uniform(k_b, (out_c,), jnp.float32, -bound, bound)

    x = jax.random.normal(k_x, (N, in_c, H, W), jnp.float32)

    out = multiscale_randconv2d_forward(x, weight, bias, pad)
    out = jax.block_until_ready(out)

    ref = _reference_forward(x, weight, bias, pad)
    max_err = float(jnp.max(jnp.abs(out - ref)))
    assert out.shape == ref.shape, (out.shape, ref.shape)
    assert max_err < 1e-4, f"max abs error {max_err}"

    print("KERNEL_OK")
</pallas_src>

<mosaic_0001>
module attributes {stable_mosaic.version = 11 : i64} {
  func.func @_randconv_kernel(%arg0: memref<4x36xf32, #tpu.memory_space<vmem>>, %arg1: memref<36x512xf32, #tpu.memory_space<vmem>>, %arg2: memref<4x1xf32, #tpu.memory_space<vmem>>, %arg3: memref<4x512xf32, #tpu.memory_space<vmem>>) attributes {dimension_semantics = [], scalar_prefetch = 0 : i64, scratch_operands = 0 : i64, tpu.core_type = #tpu.core_type<tc>} {
    %c0 = arith.constant 0 : index
    %c0_0 = arith.constant 0 : index
    %0 = vector.load %arg0[%c0, %c0_0] : memref<4x36xf32, #tpu.memory_space<vmem>>, vector<4x36xf32>
    %c0_1 = arith.constant 0 : index
    %c0_2 = arith.constant 0 : index
    %1 = vector.load %arg1[%c0_1, %c0_2] : memref<36x512xf32, #tpu.memory_space<vmem>>, vector<36x512xf32>
    %cst = arith.constant dense<0.000000e+00> : vector<4x512xf32>
    %2 = tpu.matmul %0, %1, %cst {dimension_numbers = #tpu.dot_dimension_numbers<[1], [0], [0], [1], [0, 0, 1, 1], [], []>} : vector<4x36xf32>, vector<36x512xf32>, vector<4x512xf32> -> vector<4x512xf32>
    %c0_3 = arith.constant 0 : index
    %c0_4 = arith.constant 0 : index
    %3 = vector.load %arg2[%c0_3, %c0_4] : memref<4x1xf32, #tpu.memory_space<vmem>>, vector<4x1xf32>
    %4 = vector.broadcast %3 : vector<4x1xf32> to vector<4x512xf32>
    %5 = arith.addf %2, %4 : vector<4x512xf32>
    %6 = vector.extract_strided_slice %5 {offsets = [0, 0], sizes = [1, 256], strides = [1, 1]} : vector<4x512xf32> to vector<1x256xf32>
    %cst_5 = arith.constant dense<0xFF800000> : vector<1xf32>
    %7 = vector.multi_reduction <maximumf>, %6, %cst_5 [1] : vector<1x256xf32> to vector<1xf32>
    %8 = vector.shape_cast %7 : vector<1xf32> to vector<1x1xf32>
    %cst_6 = arith.constant dense<0x7F800000> : vector<1xf32>
    %9 = vector.multi_reduction <minimumf>, %6, %cst_6 [1] : vector<1x256xf32> to vector<1xf32>
    %10 = vector.shape_cast %9 : vector<1xf32> to vector<1x1xf32>
    %11 = tpu.iota {dimensions = array<i32: 1>} : vector<1x256xi32>
    %c85_i32 = arith.constant 85 : i32
    %12 = vector.broadcast %c85_i32 : i32 to vector<1x256xi32>
    %13 = arith.cmpi eq, %11, %12 : vector<1x256xi32>
    %cst_7 = arith.constant 0.000000e+00 : f32
    %14 = vector.broadcast %cst_7 : f32 to vector<1x256xf32>
    %15 = arith.select %13, %6, %14 : vector<1x256xi1>, vector<1x256xf32>
    %cst_8 = arith.constant dense<0.000000e+00> : vector<1xf32>
    %16 = vector.multi_reduction <add>, %15, %cst_8 [1] : vector<1x256xf32> to vector<1xf32>
    %17 = vector.shape_cast %16 : vector<1xf32> to vector<1x1xf32>
    %18 = arith.subf %8, %17 : vector<1x1xf32>
    %19 = arith.subf %17, %10 : vector<1x1xf32>
    %20 = arith.cmpf olt, %18, %19 : vector<1x1xf32>
    %cst_9 = arith.constant 0.000000e+00 : f32
    %21 = vector.broadcast %cst_9 : f32 to vector<4x512xf32>
    %22 = arith.subf %21, %5 : vector<4x512xf32>
    %23 = vector.shape_cast %20 : vector<1x1xi1> to vector<1x1xi1>
    %24 = vector.broadcast %23 : vector<1x1xi1> to vector<4x512xi1>
    %25 = arith.select %24, %22, %5 : vector<4x512xi1>, vector<4x512xf32>
    %c0_10 = arith.constant 0 : index
    %c0_11 = arith.constant 0 : index
    %26 = vector.load %arg3[%c0_10, %c0_11] : memref<4x512xf32, #tpu.memory_space<vmem>>, vector<4x512xf32>
    tpu.vector_store %arg3[%c0_10, %c0_11], %25 {strides = array<i32>} : memref<4x512xf32, #tpu.memory_space<vmem>>, vector<4x512xf32>,
    return
  }
}

</mosaic_0001>

<llo_original>
// kernel: tpu_custom_call.1
$region0: #{tpu_custom_call.1}
  #allocation0 [shape = 'u32[]', space=smem, size = 0x4, offset = 0x4, fixed_abs, tag = 'smem constant byte address 0x4 - core index']
  #allocation1 [shape = 'u32[144,128]{1,0:T(1,128)}', space=vmem, size = 0x12000, scoped, tag = 'internal scratch']
  %s0 = inlined_call_operand.vmem [shape: f32[4,36], index: 0, kind: input, shape index: {}]
  %s1 = inlined_call_operand.hbm [shape: f32[36,512], index: 1, kind: input, shape index: {}]
  %s2 = inlined_call_operand.vmem [shape: f32[4,1], index: 2, kind: input, shape index: {}]
  %s3 = inlined_call_operand.hbm [shape: f32[4,512], index: 3, kind: output, shape index: {}]
  %s4 = sld [smem:[#allocation0]]
  $region26: #{tpu_custom_call.1} parent=0
    _
  %s6 = ssub.s32 1, %s4
  %s7 = scalar_select 0, %s6, %s4
  $region1: #{tpu_custom_call.1} parent=0
    #allocation2 [shape = 'u8[81920]{0}', space=vmem, size = 0x14000, scoped, tag = 'input window, operand 1, single buffered']
    #allocation3 [shape = 's32[1]{0}', space=sflag, size = 0x4, scoped, tag = 'scoped memory for tpu_custom_call.1']
    #allocation4 [shape = 's32[1]{0}', space=sflag, size = 0x4, scoped, tag = 'scoped memory for tpu_custom_call.1']
    #allocation5 [shape = 'u8[8192]{0}', space=vmem, size = 0x2000, scoped, tag = 'output window, operand 0, single buffered']
    %8 = vsyncpa [#allocation3], 0
    %9 = vsyncpa [#allocation4], 0
    // Predicated region
    $region2: #{tpu_custom_call.1} parent=1 // pred_check
      _
    $region3: #{tpu_custom_call.1} parent=1 // pred_check_branch
      %11 = sbr.rel (0) target = $region5
    $region4: #{tpu_custom_call.1} parent=1 // pred_region
      _
    $region5: #{tpu_custom_call.1} parent=1 // pred_fallthru
      _
    // Predicated region
    $region6: #{tpu_custom_call.1} parent=1 // pred_check
      _
    $region7: #{tpu_custom_call.1} parent=1 // pred_check_branch
      %13 = sbr.rel (0) target = $region9
    $region8: #{tpu_custom_call.1} parent=1 // pred_region
      %s15 = ssub.s32 2560, 2560
      %16 = vsyncadd [#allocation3], %s15
      %s17 = sshll.u32 [#allocation2], 4
      %s18 = int_to_ptr.vmem [resolvable:$true] %s17
      %23 = dma.hbm_to_vmem [thread:$0]  %s1, 2560, %s18, [#allocation3], 512, 512, 32
    $region9: #{tpu_custom_call.1} parent=1 // pred_fallthru
      _
    // Predicated region
    $region10: #{tpu_custom_call.1} parent=1 // pred_check
      _
    $region11: #{tpu_custom_call.1} parent=1 // pred_check_branch
      %25 = sbr.rel (0) target = $region13
    $region12: #{tpu_custom_call.1} parent=1 // pred_region
      _
    $region13: #{tpu_custom_call.1} parent=1 // pred_fallthru
      _
    // Predicated region
    $region14: #{tpu_custom_call.1} parent=1 // pred_check
      _
    $region15: #{tpu_custom_call.1} parent=1 // pred_check_branch
      %27 = sbr.rel (0) target = $region17
    $region16: #{tpu_custom_call.1} parent=1 // pred_region
      %28 = dma.done [#allocation3], 2560
    $region17: #{tpu_custom_call.1} parent=1 // pred_fallthru
      _
    %v29 = vld [vmem:[%s0] sm:$0xf]
    %v30 = vld [vmem:[#allocation2] sm:$0xff]
    %v31 = vld [vmem:[#allocation2 + $0x8] sm:$0xff]
    %v32 = vld [vmem:[#allocation2 + $0x10] sm:$0xff]
    %v33 = vld [vmem:[#allocation2 + $0x18] sm:$0xff]
    %v34 = vld [vmem:[#allocation2 + $0x20] sm:$0xff]
    %v35 = vld [vmem:[#allocation2 + $0x28] sm:$0xff]
    %v36 = vld [vmem:[#allocation2 + $0x30] sm:$0xff]
    %v37 = vld [vmem:[#allocation2 + $0x38] sm:$0xff]
    %v38 = vld [vmem:[#allocation2 + $0x40] sm:$0xff]
    %v39 = vld [vmem:[#allocation2 + $0x48] sm:$0xff]
    %v40 = vld [vmem:[#allocation2 + $0x50] sm:$0xff]
    %v41 = vld [vmem:[#allocation2 + $0x58] sm:$0xff]
    %v42 = vld [vmem:[#allocation2 + $0x60] sm:$0xff]
    %v43 = vld [vmem:[#allocation2 + $0x68] sm:$0xff]
    %v44 = vld [vmem:[#allocation2 + $0x70] sm:$0xff]
    %v45 = vld [vmem:[#allocation2 + $0x78] sm:$0xff]
    %v46 = vld [vmem:[#allocation2 + $0x80] sm:$0xf]
    %v47 = vld [vmem:[#allocation2 + $0x88] sm:$0xf]
    %v48 = vld [vmem:[#allocation2 + $0x90] sm:$0xf]
    %v49 = vld [vmem:[#allocation2 + $0x98] sm:$0xf]
    %v50 = vld [vmem:[%s2] sm:$0xf]
    %52 = vset.pattern.permute.xlu0 0
    %53 = vperm.xlu0 %52, %v50
    %v54 = vpop.permute.xlu0 %53
    %vm56 = vcmask 293888
    %v58 = vsel %vm56, %v29, 0
    %vm60 = vcmask 1043456
    %v62 = vsel %vm60, %v46, 0
    %v65 = vsel %vm60, %v47, 0
    %v68 = vsel %vm60, %v48, 0
    %v71 = vsel %vm60, %v49, 0
    %73 = vmatprep.subr.mxu0 %v31
    %74 = vmatpush1.msra.mxu0 %v30
    %75 = vmatprep.subr.mxu0 %v35
    %76 = vmatpush1.msra.mxu0 %v34
    %77 = vmatprep.subr.mxu0 %v39
    %78 = vmatpush1.msra.mxu0 %v38
    %79 = vmatprep.subr.mxu0 %v43
    %80 = vmatpush1.msra.mxu0 %v42
    %81 = vmatprep.subr.mxu0 %v65
    %82 = vmatpush1.msra.mxu0 %v62
    %83 = vmatprep.subr.mxu0 0.0
    %84 = vmatpush1.msra.mxu0 0.0
    %85 = vmatprep.subr.mxu0 0.0
    %86 = vmatpush1.msra.mxu0 0.0
    %87 = vmatprep.subr.mxu0 0.0
    %88 = vmatpush1.msra.mxu0 0.0
    %89 = vmatprep.subr.mxu0 0.0
    %90 = vmatpush1.msra.mxu0 0.0
    %91 = vmatprep.subr.mxu0 0.0
    %92 = vmatpush1.msra.mxu0 0.0
    %93 = vmatprep.subr.mxu0 0.0
    %94 = vmatpush1.msra.mxu0 0.0
    %95 = vmatprep.subr.mxu0 0.0
    %96 = vmatpush1.msra.mxu0 0.0
    %97 = vmatprep.subr.mxu0 0.0
    %98 = vmatpush1.msra.mxu0 0.0
    %99 = vmatprep.subr.mxu0 0.0
    %100 = vmatpush1.msra.mxu0 0.0
    %101 = vmatprep.subr.mxu0 0.0
    %102 = vmatpush1.msra.mxu0 0.0
    %103 = vmatprep.subr.mxu0 0.0
    %104 = vmatpush1.msra.mxu0 0.0
    %105 = vmatprep.subr.mxu0 0.0
    %106 = vmatpush1.msra.mxu0 0.0
    %107 = vmatprep.subr.mxu0 0.0
    %108 = vmatpush1.msra.mxu0 0.0
    %109 = vmatprep.subr.mxu0 0.0
    %110 = vmatpush1.msra.mxu0 0.0
    %111 = vmatprep.subr.mxu0 0.0
    %112 = vmatpush1.msra.mxu0 0.0
    %113 = vmatprep.subr.mxu0 0.0
    %114 = vmatpush1.msra.mxu0 0.0
    %115 = vmatprep.subr.mxu0 0.0
    %116 = vmatpush1.msra.mxu0 0.0
    %117 = vmatprep.subr.mxu0 0.0
    %118 = vmatpush1.msra.mxu0 0.0
    %119 = vmatprep.subr.mxu0 0.0
    %120 = vmatpush1.msra.mxu0 0.0
    %121 = vmatprep.subr.mxu0 0.0
    %122 = vmatpush1.msra.mxu0 0.0
    %123 = vmatprep.subr.mxu0 0.0
    %124 = vmatpush1.msra.mxu0 0.0
    %125 = vmatprep.subr.mxu0 0.0
    %126 = vmatpush1.msra.mxu0 0.0
    %127 = vmatprep.subr.mxu0 0.0
    %128 = vmatpush1.msra.mxu0 0.0
    %129 = vmatprep.subr.mxu0 0.0
    %130 = vmatpush1.msra.mxu0 0.0
    %131 = vmatprep.subr.mxu0 0.0
    %132 = vmatpush1.msra.mxu0 0.0
    %133 = vmatprep.subr.mxu0 0.0
    %134 = vmatpush1.msra.mxu0 0.0
    %135 = vmatprep.subr.mxu0 0.0
    %136 = vmatpush1.msra.mxu0 0.0
    %137 = vmatprep.mubr.f32.mxu0 0.0
    %138 = vmatmul.mubr.f32.gmra.mrb[0].mxu0 %v58
    %v139 = vpop.f32.mrb[0].mxu0
    %v140 = vadd.f32 %v54, %v139
    %v141 = vpop.f32.mrb[0].mxu0
    %v142 = vadd.f32 %v54, %v141
    %143 = vdwg.mxu0
    %144 = vmatprep.subr.mxu0 %v33
    %145 = vmatpush1.msra.mxu0 %v32
    %146 = vmatprep.subr.mxu0 %v37
    %147 = vmatpush1.msra.mxu0 %v36
    %148 = vmatprep.subr.mxu0 %v41
    %149 = vmatpush1.msra.mxu0 %v40
    %150 = vmatprep.subr.mxu0 %v45
    %151 = vmatpush1.msra.mxu0 %v44
    %152 = vmatprep.subr.mxu0 %v71
    %153 = vmatpush1.msra.mxu0 %v68
    %154 = vmatprep.subr.mxu0 0.0
    %155 = vmatpush1.msra.mxu0 0.0
    %156 = vmatprep.subr.mxu0 0.0
    %157 = vmatpush1.msra.mxu0 0.0
    %158 = vmatprep.subr.mxu0 0.0
    %159 = vmatpush1.msra.mxu0 0.0
    %160 = vmatprep.subr.mxu0 0.0
    %161 = vmatpush1.msra.mxu0 0.0
    %162 = vmatprep.subr.mxu0 0.0
    %163 = vmatpush1.msra.mxu0 0.0
    %164 = vmatprep.subr.mxu0 0.0
    %165 = vmatpush1.msra.mxu0 0.0
    %166 = vmatprep.subr.mxu0 0.0
    %167 = vmatpush1.msra.mxu0 0.0
    %168 = vmatprep.subr.mxu0 0.0
    %169 = vmatpush1.msra.mxu0 0.0
    %170 = vmatprep.subr.mxu0 0.0
    %171 = vmatpush1.msra.mxu0 0.0
    %172 = vmatprep.subr.mxu0 0.0
    %173 = vmatpush1.msra.mxu0 0.0
    %174 = vmatprep.subr.mxu0 0.0
    %175 = vmatpush1.msra.mxu0 0.0
    %176 = vmatprep.subr.mxu0 0.0
    %177 = vmatpush1.msra.mxu0 0.0
    %178 = vmatprep.subr.mxu0 0.0
    %179 = vmatpush1.msra.mxu0 0.0
    %180 = vmatprep.subr.mxu0 0.0
    %181 = vmatpush1.msra.mxu0 0.0
    %182 = vmatprep.subr.mxu0 0.0
    %183 = vmatpush1.msra.mxu0 0.0
    %184 = vmatprep.subr.mxu0 0.0
    %185 = vmatpush1.msra.mxu0 0.0
    %186 = vmatprep.subr.mxu0 0.0
    %187 = vmatpush1.msra.mxu0 0.0
    %188 = vmatprep.subr.mxu0 0.0
    %189 = vmatpush1.msra.mxu0 0.0
    %190 = vmatprep.subr.mxu0 0.0
    %191 = vmatpush1.msra.mxu0 0.0
    %192 = vmatprep.subr.mxu0 0.0
    %193 = vmatpush1.msra.mxu0 0.0
    %194 = vmatprep.subr.mxu0 0.0
    %195 = vmatpush1.msra.mxu0 0.0
    %196 = vmatprep.subr.mxu0 0.0
    %197 = vmatpush1.msra.mxu0 0.0
    %198 = vmatprep.subr.mxu0 0.0
    %199 = vmatpush1.msra.mxu0 0.0
    %200 = vmatprep.subr.mxu0 0.0
    %201 = vmatpush1.msra.mxu0 0.0
    %202 = vmatprep.subr.mxu0 0.0
    %203 = vmatpush1.msra.mxu0 0.0
    %204 = vmatprep.subr.mxu0 0.0
    %205 = vmatpush1.msra.mxu0 0.0
    %206 = vmatprep.subr.mxu0 0.0
    %207 = vmatpush1.msra.mxu0 0.0
    %208 = vmatprep.mubr.f32.mxu0 0.0
    %209 = vmatmul.mubr.f32.gmra.mrb[0].mxu0 %v58
    %v210 = vpop.f32.mrb[0].mxu0
    %v211 = vadd.f32 %v54, %v210
    %v212 = vpop.f32.mrb[0].mxu0
    %v213 = vadd.f32 %v54, %v212
    %214 = vdwg.mxu0
    %vm215 = vcmask 1040384
    %v216 = vsel %vm215, %v140, -inf
    %v217 = vsel %vm215, %v142, -inf
    %v218 = vmax.f32 %v216, %v217
    %219 = vmax.xlane.f32.xlu0 %v218
    %v220 = vpop.xlane.xlu0 %219
    %v221 = vsel %vm215, %v140, inf
    %v222 = vsel %vm215, %v142, inf
    %v223 = vmin.f32 %v221, %v222
    %224 = vmin.xlane.f32.xlu0 %v223
    %v225 = vpop.xlane.xlu0 %224
    %v226 = vlaneseq
    %v227 = vand.u32 %v226, 127
    %v228 = vadd.s32 %v227, 128
    %vm229 = vcmp.eq.s32.totalorder %v227, 85
    %vm230 = vcmp.eq.s32.totalorder %v228, 85
    %v231 = vsel %vm229, %v140, 0.0
    %v232 = vsel %vm230, %v142, 0.0
    %v233 = vsel %vm215, %v231, 0.0
    %v234 = vsel %vm215, %v232, 0.0
    %v235 = vadd.f32 %v233, %v234
    %236 = vadd.xlane.f32.xlu0 %v235
    %v237 = vpop.xlane.xlu0 %236
    %v238 = vsub.f32 %v220, %v237
    %v239 = vsub.f32 %v237, %v225
    %vm240 = vcmp.lt.f32.partialorder %v238, %v239
    %v241 = vsub.f32 0.0, %v140
    %v242 = vsub.f32 0.0, %v142
    %v243 = vsub.f32 0.0, %v211
    %v244 = vsub.f32 0.0, %v213
    %v245 = vsel %vm240, 1, 0
    %v246 = vlaneseq
    %v247 = vshrl.u32 %v246, 7
    %v248 = vsub.s32 0, %v247
    %v249 = vrot.slane %v245, %v248
    %vm250 = vcmp.eq.s32.totalorder %v249, 1
    %v251 = vsel %vm250, %v241, %v140
    %v252 = vsel %vm250, %v242, %v142
    %v253 = vsel %vm250, %v243, %v211
    %v254 = vsel %vm250, %v244, %v213
    %v259 = vcombine.low %v251, %v252
    %v260 = vcombine.low %v253, %v254
    %263 = vst [vmem:[#allocation5] sm:$0xff] %v259
    %264 = vst [vmem:[#allocation5 + $0x8] sm:$0xff] %v260
    // Predicated region
    $region18: #{tpu_custom_call.1} parent=1 // pred_check
      _
    $region19: #{tpu_custom_call.1} parent=1 // pred_check_branch
      %266 = sbr.rel (0) target = $region21
    $region20: #{tpu_custom_call.1} parent=1 // pred_region
      %s268 = ssub.s32 256, 256
      %269 = vsyncadd [#allocation4], %s268
      %s271 = sshll.u32 [#allocation5], 4
      %s272 = int_to_ptr.vmem [resolvable:$true] %s271
      %274 = dma.vmem_to_hbm [thread:$0]  %s272, 256, %s3, [#allocation4]
    $region21: #{tpu_custom_call.1} parent=1 // pred_fallthru
      _
    // Predicated region
    $region22: #{tpu_custom_call.1} parent=1 // pred_check
      _
    $region23: #{tpu_custom_call.1} parent=1 // pred_check_branch
      %276 = sbr.rel (0) target = $region25
    $region24: #{tpu_custom_call.1} parent=1 // pred_region
      %277 = dma.done [#allocation4], 256
    $region25: #{tpu_custom_call.1} parent=1 // pred_fallthru
      _
    %278 = vsyncpa [#allocation3], 1
    %279 = vsyncpa [#allocation4], 1

</llo_original>
